<compile_context>
chip_gen: v7x
topology: tpu7x:2x2x1
jax: 0.10.0
libtpu: 0.0.40
codegen_flags: <defaults>
</compile_context>

<pallas_src>
import math

import jax
import jax.numpy as jnp
from jax.experimental import pallas as pl
from jax.experimental.pallas import tpu as pltpu


# ---------------------------------------------------------------------------
# Pallas kernel: one row tile of  out = ReLU( (mask @ z) * dinv )
# ---------------------------------------------------------------------------
def gnn_layer_kernel(mask_ref, z_ref, dinv_ref, o_ref):
    # int8 0/1 adjacency -> bf16 just before the MXU feed (VPU cast hides under
    # the mask DMA); bf16 x bf16 with f32 accumulation is the native MXU path.
    mask = mask_ref[...].astype(jnp.bfloat16)                            # (TILE_N, N)
    y = jnp.dot(mask, z_ref[...], preferred_element_type=jnp.float32)    # (TILE_N, H_out_pad)
    # Degree normalization (reciprocal precomputed in the wrapper) + ReLU.
    # NOTE: isolated nodes (zero in-degree) give inf * 0 = NaN, exactly like
    # torch.div(1.0, mask.sum(-2)) in the reference module.
    o_ref[...] = jnp.maximum(y * dinv_ref[...], 0.0)


# ---------------------------------------------------------------------------
# Generation-aware tiling / VMEM budget
# ---------------------------------------------------------------------------
def _vmem_capacity_bytes():
    try:
        return int(pltpu.get_tpu_info().vmem_capacity_bytes)
    except Exception:
        return 64 * 1024 * 1024          # conservative: v7x per-TensorCore VMEM


def _vmem_limit_bytes():
    # ~3/4 of physical VMEM: 96 MiB on v5e/v6e (128 MiB), 48 MiB on v7x (64 MiB).
    return min(96 * 1024 * 1024, (_vmem_capacity_bytes() * 3) // 4)


def _pick_row_tile(n, mask_itemsize, resident_bytes, out_pad, vmem_limit):
    """Largest row tile that (a) keeps the double-buffered mask + output tiles
    plus the resident z block under the VMEM limit with headroom and (b) still
    gives >= 2 (ideally >= 4) grid steps for megacore sharding + pipelining."""
    if n <= 32:
        return n                                               # single full block
    # per-row bytes: 2x mask buffer + its bf16 cast + 2x f32 output + dinv slab
    row_cost = 2 * n * mask_itemsize + 2 * n + 2 * out_pad * 4 + 2 * 128 * 4
    avail = vmem_limit - resident_bytes - (4 * 1024 * 1024)    # misc-scratch slack
    t = max(32, avail // row_cost) if avail > 0 else 32
    t = min(t, 512, n)                                         # 512 ~ pipeline sweet spot
    target_steps = 4 if n >= 128 else 2                        # keep both TCs busy on v7x
    t = min(t, max(32, n // target_steps))
    t = (t // 32) * 32                                         # int8 sublane packing
    return max(32, min(t, n))


# ---------------------------------------------------------------------------
# GNNLayer.forward
# ---------------------------------------------------------------------------
def gnn_layer_forward(x, mask, weight, bias, *, mask_q=None, dinv=None):
    """GNNLayer.forward.  Glue (z = x @ W.T + bias, mask quantization, padding)
    runs in XLA; the HBM-bound `mask @ z` aggregation runs in Pallas.

    NOTE: the adjacency is shipped as int8, which is exact only for binary 0/1
    masks (the GNN use case).  Pass a pre-built `mask_q` / `dinv` to reuse one
    device copy across layers (or to supply bf16 for non-binary masks).
    """
    n, _ = x.shape
    out_dim = weight.shape[0]
    out_pad = ((out_dim + 127) // 128) * 128                 # lane-dense output width

    # z[j] = x[j] @ W.T + bias  (tiny (N, H_in) x (H_in, H_out) matmul, left to
    # XLA); carried in bf16 so the kernel matmul uses the native MXU path.
    z = x.astype(jnp.float32) @ weight.T.astype(jnp.float32) + bias.astype(jnp.float32)
    z = jnp.pad(z, ((0, 0), (0, out_pad - out_dim))).astype(jnp.bfloat16)  # (N, H_out_pad)
    # TODO(synk): for very large N * H_out the resident z block should be
    # column-tiled via a second grid axis; not needed at these sizes.

    if mask_q is None:
        mask_q = mask.astype(jnp.int8)                       # exact for 0/1 adjacency
    if dinv is None:
        # degree reciprocal = 1 / column sums (torch: mask.sum(-2)); isolated
        # nodes give inf, matching torch.div(1.0, ...).
        dinv = (1.0 / jnp.sum(mask.astype(jnp.float32), axis=0)).reshape(n, 1)
    dinv = dinv.astype(jnp.float32)

    vmem_limit = _vmem_limit_bytes()
    tn = _pick_row_tile(n, mask_q.dtype.itemsize, n * out_pad * 2, out_pad, vmem_limit)
    grid = (pl.cdiv(n, tn),)

    out = pl.pallas_call(
        gnn_layer_kernel,
        out_shape=jax.ShapeDtypeStruct((n, out_pad), jnp.float32),
        grid_spec=pltpu.PrefetchScalarGridSpec(
            num_scalar_prefetch=0,
            grid=grid,
            in_specs=[
                pl.BlockSpec((tn, n), lambda i: (i, 0)),         # int8 adjacency row tile
                pl.BlockSpec((n, out_pad), lambda i: (0, 0)),    # resident z (bf16)
                pl.BlockSpec((tn, 1), lambda i: (i, 0)),         # degree reciprocal
            ],
            out_specs=pl.BlockSpec((tn, out_pad), lambda i: (i, 0)),
        ),
        compiler_params=pltpu.CompilerParams(
            dimension_semantics=("parallel",),                   # shard rows across TCs
            vmem_limit_bytes=vmem_limit,
        ),
    )(mask_q, z, dinv)
    return out[:, :out_dim]


# ---------------------------------------------------------------------------
# GNN.forward
# ---------------------------------------------------------------------------
def gnn_forward(adjacency, graph, layer_params):
    """Mirror of GNN.forward: h[0] = graph; h[k] = layer_k(h[k-1], adjacency.T)
    for k = 1..depth-1 (layer 0 of the PyTorch module is never applied).
    The int8 adjacency and degree reciprocal are built once and reused by
    every layer (no per-layer re-cast)."""
    # TODO(synk): PyTorch GNN stores embeddings in-place in self.h; here the
    # stacked embeddings are returned as an array instead.
    # TODO(synk): for deep stacks where N^2 int8 fits VMEM, fuse all layers
    # into one pallas_call with the adjacency resident across a depth grid
    # axis so the N^2 mask is streamed from HBM only once.
    mask = adjacency.T
    mask_q = mask.astype(jnp.int8)
    dinv = (1.0 / jnp.sum(mask.astype(jnp.float32), axis=0)).reshape(-1, 1)
    h = [graph]
    for (w, b) in layer_params[1:]:
        h.append(gnn_layer_forward(h[-1], mask, w, b, mask_q=mask_q, dinv=dinv))
    return jnp.stack(h)


# ---------------------------------------------------------------------------
# Param init + pure-JAX references
# ---------------------------------------------------------------------------
def init_linear_params(key, in_dim, out_dim):
    """Deterministic init matching nn.Linear defaults (kaiming_uniform a=sqrt(5))."""
    kw, kb = jax.random.split(key)
    bound = 1.0 / math.sqrt(in_dim)
    weight = jax.random.uniform(kw, (out_dim, in_dim), jnp.float32, -bound, bound)
    bias = jax.random.uniform(kb, (out_dim,), jnp.float32, -bound, bound)
    return weight, bias


def reference_layer(x, mask, weight, bias):
    """Pure-JAX (f32) reference mirroring the PyTorch GNNLayer literally."""
    n = mask.shape[1]
    m = mask[..., None]                                          # (N, N, 1)
    inp = jnp.broadcast_to(x[None, :, :], (n,) + x.shape) * m    # (N, N, H_in)
    msg = inp @ weight.T + bias * m                              # (N, N, H_out)
    summed = jnp.sum(msg, axis=1)                                # (N, H_out)
    deg_inv = 1.0 / jnp.sum(mask, axis=-2)                       # (N,)
    return jax.nn.relu(jnp.einsum('i,ij->ij', deg_inv, summed))


def reference_gnn(adjacency, graph, layer_params):
    mask = adjacency.T
    h = [graph]
    for (w, b) in layer_params[1:]:
        h.append(reference_layer(h[-1], mask, w, b))
    return jnp.stack(h)


if __name__ == "__main__":
    key = jax.random.PRNGKey(0)
    k_x, k_m, k_p, k_g, k_a, k_l = jax.random.split(key, 6)

    # --- single GNNLayer (in_dim != out_dim, single row tile) ---
    N, IN_DIM, OUT_DIM = 8, 16, 32
    x = jax.random.normal(k_x, (N, IN_DIM), jnp.float32)
    mask = (jax.random.uniform(k_m, (N, N)) > 0.5).astype(jnp.float32)
    mask = jnp.maximum(mask, jnp.eye(N, dtype=jnp.float32))   # self-loops -> no zero degrees
    weight, bias = init_linear_params(k_p, IN_DIM, OUT_DIM)

    out = jax.block_until_ready(gnn_layer_forward(x, mask, weight, bias))
    ref = reference_layer(x, mask, weight, bias)
    assert out.shape == (N, OUT_DIM)
    # z is carried in bf16 (the binary mask itself is exact in int8) -> loosened tol.
    assert jnp.allclose(out, ref, atol=3e-2, rtol=3e-2), float(jnp.max(jnp.abs(out - ref)))

    # --- stacked GNN: multi-tile row grid (N=96 -> 3 parallel tiles of 32 rows) ---
    DEPTH, N2, EMBED = 3, 96, 32
    graph = jax.random.normal(k_g, (N2, EMBED), jnp.float32)
    adj = (jax.random.uniform(k_a, (N2, N2)) > 0.5).astype(jnp.float32)
    adj = jnp.maximum(adj, jnp.eye(N2, dtype=jnp.float32))
    params = [init_linear_params(k, EMBED, EMBED) for k in jax.random.split(k_l, DEPTH)]

    h = jax.block_until_ready(gnn_forward(adj, graph, params))
    h_ref = reference_gnn(adj, graph, params)
    assert h.shape == (DEPTH, N2, EMBED)
    assert jnp.allclose(h, h_ref, atol=5e-2, rtol=5e-2), float(jnp.max(jnp.abs(h - h_ref)))

    print("KERNEL_OK")
</pallas_src>

<mosaic_0001>
module attributes {stable_mosaic.version = 11 : i64} {
  func.func @gnn_layer_kernel(%arg0: i32, %arg1: memref<8x8xi8, #tpu.memory_space<vmem>>, %arg2: memref<8x128xbf16, #tpu.memory_space<vmem>>, %arg3: memref<8x1xf32, #tpu.memory_space<vmem>>, %arg4: memref<8x128xf32, #tpu.memory_space<vmem>>) attributes {dimension_semantics = [#tpu.dimension_semantics<parallel>], iteration_bounds = array<i64: 1>, scalar_prefetch = 0 : i64, scratch_operands = 0 : i64, tpu.core_type = #tpu.core_type<tc>, window_params = [{transform_indices = @transform_0, window_bounds = array<i64: 8, 8>}, {pipeline_mode = #tpu.pipeline_mode<synchronous>, transform_indices = @transform_1, window_bounds = array<i64: 8, 128>}, {transform_indices = @transform_2, window_bounds = array<i64: 8, 1>}, {transform_indices = @transform_3, window_bounds = array<i64: 8, 128>}]} {
    %c0 = arith.constant 0 : index
    %c0_0 = arith.constant 0 : index
    %0 = vector.load %arg1[%c0, %c0_0] : memref<8x8xi8, #tpu.memory_space<vmem>>, vector<8x8xi8>
    %1 = arith.sitofp %0 : vector<8x8xi8> to vector<8x8xbf16>
    %c0_1 = arith.constant 0 : index
    %c0_2 = arith.constant 0 : index
    %2 = vector.load %arg2[%c0_1, %c0_2] : memref<8x128xbf16, #tpu.memory_space<vmem>>, vector<8x128xbf16>
    %cst = arith.constant dense<0.000000e+00> : vector<8x128xf32>
    %3 = tpu.matmul %1, %2, %cst {dimension_numbers = #tpu.dot_dimension_numbers<[1], [0], [0], [1], [0, 0, 1, 1], [], []>} : vector<8x8xbf16>, vector<8x128xbf16>, vector<8x128xf32> -> vector<8x128xf32>
    %c0_3 = arith.constant 0 : index
    %c0_4 = arith.constant 0 : index
    %4 = vector.load %arg3[%c0_3, %c0_4] : memref<8x1xf32, #tpu.memory_space<vmem>>, vector<8x1xf32>
    %5 = vector.broadcast %4 : vector<8x1xf32> to vector<8x128xf32>
    %6 = arith.mulf %3, %5 : vector<8x128xf32>
    %cst_5 = arith.constant 0.000000e+00 : f32
    %7 = vector.broadcast %cst_5 : f32 to vector<8x128xf32>
    %8 = arith.maximumf %6, %7 : vector<8x128xf32>
    %c0_6 = arith.constant 0 : index
    %c0_7 = arith.constant 0 : index
    %9 = vector.load %arg4[%c0_6, %c0_7] : memref<8x128xf32, #tpu.memory_space<vmem>>, vector<8x128xf32>
    tpu.vector_store %arg4[%c0_6, %c0_7], %8 {strides = array<i32>} : memref<8x128xf32, #tpu.memory_space<vmem>>, vector<8x128xf32>,
    return
  }
  func.func @transform_0(%arg0: i32) -> (i32, i32) {
    %c0_i32 = arith.constant 0 : i32
    %c0_i32_0 = arith.constant 0 : i32
    return %arg0, %c0_i32 : i32, i32
  }
  func.func @transform_1(%arg0: i32) -> (i32, i32) {
    %c0_i32 = arith.constant 0 : i32
    %c0_i32_0 = arith.constant 0 : i32
    %c0_i32_1 = arith.constant 0 : i32
    return %c0_i32, %c0_i32_0 : i32, i32
  }
  func.func @transform_2(%arg0: i32) -> (i32, i32) {
    %c0_i32 = arith.constant 0 : i32
    %c0_i32_0 = arith.constant 0 : i32
    return %arg0, %c0_i32 : i32, i32
  }
  func.func @transform_3(%arg0: i32) -> (i32, i32) {
    %c0_i32 = arith.constant 0 : i32
    %c0_i32_0 = arith.constant 0 : i32
    return %arg0, %c0_i32 : i32, i32
  }
}

</mosaic_0001>

<llo_original>
// kernel: tpu_custom_call.1
$region0: #{tpu_custom_call.1}
  #allocation0 [shape = 'u32[]', space=smem, size = 0x4, offset = 0x4, fixed_abs, tag = 'smem constant byte address 0x4 - core index']
  #allocation1 [shape = 'u32[144,128]{1,0:T(1,128)}', space=vmem, size = 0x12000, scoped, tag = 'internal scratch']
  %s0 = inlined_call_operand.vmem [shape: s8[8,8], index: 0, kind: input, shape index: {}]
  %s1 = inlined_call_operand.vmem [shape: bf16[8,128], index: 1, kind: input, shape index: {}]
  %s2 = inlined_call_operand.vmem [shape: f32[8,1], index: 2, kind: input, shape index: {}]
  %s3 = inlined_call_operand.hbm [shape: f32[8,128], index: 3, kind: output, shape index: {}]
  %s4 = sld [smem:[#allocation0]]
  $region22: #{tpu_custom_call.1} parent=0
    _
  %s6 = ssub.s32 1, %s4
  %s7 = scalar_select 0, %s6, %s4
  $region1: #{tpu_custom_call.1} parent=0
    #allocation2 [shape = 'u8[4096]{0}', space=vmem, size = 0x1000, scoped, tag = 'output window, operand 0, single buffered']
    #allocation3 [shape = 's32[1]{0}', space=sflag, size = 0x4, scoped, tag = 'scoped memory for tpu_custom_call.1']
    %8 = vsyncpa [#allocation3], 0
    // Predicated region
    $region2: #{tpu_custom_call.1} parent=1 // pred_check
      _
    $region3: #{tpu_custom_call.1} parent=1 // pred_check_branch
      %10 = sbr.rel (0) target = $region5
    $region4: #{tpu_custom_call.1} parent=1 // pred_region
      _
    $region5: #{tpu_custom_call.1} parent=1 // pred_fallthru
      _
    // Predicated region
    $region6: #{tpu_custom_call.1} parent=1 // pred_check
      _
    $region7: #{tpu_custom_call.1} parent=1 // pred_check_branch
      %12 = sbr.rel (0) target = $region9
    $region8: #{tpu_custom_call.1} parent=1 // pred_region
      _
    $region9: #{tpu_custom_call.1} parent=1 // pred_fallthru
      _
    // Predicated region
    $region10: #{tpu_custom_call.1} parent=1 // pred_check
      _
    $region11: #{tpu_custom_call.1} parent=1 // pred_check_branch
      %14 = sbr.rel (0) target = $region13
    $region12: #{tpu_custom_call.1} parent=1 // pred_region
      _
    $region13: #{tpu_custom_call.1} parent=1 // pred_fallthru
      _
    %v16 = vld [vmem:[%s0] sm:$0x3]
    %v17 = vunpack.c.l.s8.bf16 %v16
    %v18 = vld [vmem:[%s1] sm:$0xf]
    %vm19 = vcmask 64512
    %v21 = vsel %vm19, %v17, 0
    %vm23 = vcmask 1043456
    %v25 = vsel %vm23, %v18, 0
    %27 = vmatprep.subr.bf16.mxu0 0
    %28 = vmatpush1.bf16.msra.mxu0 %v25
    %29 = vmatprep.subr.bf16.mxu0 0
    %30 = vmatpush1.bf16.msra.mxu0 0
    %31 = vmatprep.subr.bf16.mxu0 0
    %32 = vmatpush1.bf16.msra.mxu0 0
    %33 = vmatprep.subr.bf16.mxu0 0
    %34 = vmatpush1.bf16.msra.mxu0 0
    %35 = vmatprep.subr.bf16.mxu0 0
    %36 = vmatpush1.bf16.msra.mxu0 0
    %37 = vmatprep.subr.bf16.mxu0 0
    %38 = vmatpush1.bf16.msra.mxu0 0
    %39 = vmatprep.subr.bf16.mxu0 0
    %40 = vmatpush1.bf16.msra.mxu0 0
    %41 = vmatprep.subr.bf16.mxu0 0
    %42 = vmatpush1.bf16.msra.mxu0 0
    %43 = vmatprep.subr.bf16.mxu0 0
    %44 = vmatpush1.bf16.msra.mxu0 0
    %45 = vmatprep.subr.bf16.mxu0 0
    %46 = vmatpush1.bf16.msra.mxu0 0
    %47 = vmatprep.subr.bf16.mxu0 0
    %48 = vmatpush1.bf16.msra.mxu0 0
    %49 = vmatprep.subr.bf16.mxu0 0
    %50 = vmatpush1.bf16.msra.mxu0 0
    %51 = vmatprep.subr.bf16.mxu0 0
    %52 = vmatpush1.bf16.msra.mxu0 0
    %53 = vmatprep.subr.bf16.mxu0 0
    %54 = vmatpush1.bf16.msra.mxu0 0
    %55 = vmatprep.subr.bf16.mxu0 0
    %56 = vmatpush1.bf16.msra.mxu0 0
    %57 = vmatprep.subr.bf16.mxu0 0
    %58 = vmatpush1.bf16.msra.mxu0 0
    %59 = vmatprep.mubr.bf16.mxu0 0
    %60 = vmatmul.mubr.bf16.gmra.mrb[0].mxu0 %v21
    %v61 = vpop.f32.mrb[0].mxu0
    %v62 = vadd.f32 0.0, %v61
    %v63 = vpop.f32.mrb[0].mxu0
    %v64 = vpop.f32.mrb[0].mxu0
    %v65 = vpop.f32.mrb[0].mxu0
    %66 = vdwg.mxu0
    %v67 = vld [vmem:[%s2] sm:$0xff]
    %69 = vset.pattern.permute.xlu0 0
    %70 = vperm.xlu0 %69, %v67
    %v71 = vpop.permute.xlu0 %70
    %v73 = vmul.f32 %v62, %v71
    %v74 = vmax.f32 %v73, 0.0
    %75 = vst [vmem:[#allocation2] sm:$0xff] %v74
    // Predicated region
    $region14: #{tpu_custom_call.1} parent=1 // pred_check
      _
    $region15: #{tpu_custom_call.1} parent=1 // pred_check_branch
      %77 = sbr.rel (0) target = $region17
    $region16: #{tpu_custom_call.1} parent=1 // pred_region
      %s79 = ssub.s32 128, 128
      %80 = vsyncadd [#allocation3], %s79
      %s82 = sshll.u32 [#allocation2], 4
      %s83 = int_to_ptr.vmem [resolvable:$true] %s82
      %85 = dma.vmem_to_hbm [thread:$0]  %s83, 128, %s3, [#allocation3]
    $region17: #{tpu_custom_call.1} parent=1 // pred_fallthru
      _
    // Predicated region
    $region18: #{tpu_custom_call.1} parent=1 // pred_check
      _
    $region19: #{tpu_custom_call.1} parent=1 // pred_check_branch
      %87 = sbr.rel (0) target = $region21
    $region20: #{tpu_custom_call.1} parent=1 // pred_region
      %88 = dma.done [#allocation3], 128
    $region21: #{tpu_custom_call.1} parent=1 // pred_fallthru
      _
    %89 = vsyncpa [#allocation3], 1

</llo_original>
